<compile_context>
chip_gen: v5e
topology: v5e:2x2
jax: 0.10.0
libtpu: 0.0.40
codegen_flags: <defaults>
</compile_context>

<pallas_src>
import functools

import jax
import jax.numpy as jnp
from jax import lax
from jax.experimental import pallas as pl
from jax.experimental.pallas import tpu as pltpu

LANE = 128


def _round_up(n, m):
    return ((n + m - 1) // m) * m


def _pad2(a, rows, cols):
    """Zero-pad a 2-D array up to (rows, cols)."""
    out = jnp.zeros((rows, cols), a.dtype)
    return out.at[: a.shape[0], : a.shape[1]].set(a)


def _policy_kernel(max_action, action_dim,
                   x_ref, w1_ref, b1_ref, w2_ref, b2_ref, wh_ref, bh_ref,
                   out_ref):
    compute_dtype = w1_ref.dtype
    x = x_ref[...]

    # fc1 -> ReLU (MXU f32 accumulate, f32 elementwise on VPU)
    h1 = jnp.dot(x, w1_ref[...], preferred_element_type=jnp.float32) + b1_ref[...]
    h1 = jnp.maximum(h1, 0.0)

    # fc2 -> ReLU
    h2 = jnp.dot(h1.astype(compute_dtype), w2_ref[...],
                 preferred_element_type=jnp.float32) + b2_ref[...]
    h2 = jnp.maximum(h2, 0.0)

    # Fused heads: one matmul; columns [0, action_dim) are mu, [action_dim, 2*ad) std.
    z = jnp.dot(h2.astype(compute_dtype), wh_ref[...],
                preferred_element_type=jnp.float32) + bh_ref[...]

    mu = max_action * jnp.tanh(z)                                   # EUP tanh
    # Numerically stable softplus; exp/log1p run on the EUP alongside VPU work.
    sp = jnp.maximum(z, 0.0) + jnp.log1p(jnp.exp(-jnp.abs(z)))
    std = jnp.maximum(sp, 1e-6)

    col = lax.broadcasted_iota(jnp.int32, z.shape, 1)
    # One unmasked, lane-dense store of the full (tile_b, out_p) slab.
    out_ref[...] = jnp.where(col < action_dim, mu, std).astype(out_ref.dtype)

    # TODO(synk): the PyTorch forward raises ValueError on NaN inputs/activations;
    # Pallas kernels cannot raise host exceptions, so those checks are omitted.


def policy_net_continuous(x, params, max_action, *,
                          compute_dtype=jnp.float32, tile_b=None):
    """Full forward pass in one Pallas call.

    x:       (batch, state_dim) float32
    params:  dict with w1,b1,w2,b2,w_mu,b_mu,w_std,b_std (weights as (in, out))
    returns: (mu, std) each of shape (batch, action_dim) float32
    """
    batch, state_dim = x.shape
    hidden_dim = params["w1"].shape[1]
    hidden_dim1 = params["w2"].shape[1]
    action_dim = params["w_mu"].shape[1]

    # Lane-width (128) padding of all feature dims.
    in_p = _round_up(state_dim, LANE)
    h1_p = _round_up(hidden_dim, LANE)
    h2_p = _round_up(hidden_dim1, LANE)
    out_p = _round_up(2 * action_dim, LANE)

    # Batch tile: multiple of 16 (covers bf16 sublane packing), capped at 512 so
    # double-buffered x/out tiles stay far under the 32 MiB scoped-VMEM default.
    if tile_b is None:
        tile_b = min(512, _round_up(batch, 16))
    tile_b = max(16, _round_up(tile_b, 16))
    batch_p = _round_up(batch, tile_b)
    grid = (batch_p // tile_b,)

    # Pack / pad weights; heads fused along the output axis. Biases stay f32.
    w1 = _pad2(params["w1"].astype(compute_dtype), in_p, h1_p)
    b1 = _pad2(params["b1"].astype(jnp.float32), 1, h1_p)
    w2 = _pad2(params["w2"].astype(compute_dtype), h1_p, h2_p)
    b2 = _pad2(params["b2"].astype(jnp.float32), 1, h2_p)
    w_head = _pad2(jnp.concatenate([params["w_mu"], params["w_std"]], axis=1)
                   .astype(compute_dtype), h2_p, out_p)
    b_head = _pad2(jnp.concatenate([params["b_mu"], params["b_std"]], axis=1)
                   .astype(jnp.float32), 1, out_p)

    x_p = jnp.zeros((batch_p, in_p), compute_dtype)
    x_p = x_p.at[:batch, :state_dim].set(x.astype(compute_dtype))

    kernel = functools.partial(_policy_kernel, float(max_action), action_dim)
    const = lambda i: (0, 0)

    itemsize = jnp.dtype(compute_dtype).itemsize
    weight_bytes = sum(int(a.size) * jnp.dtype(a.dtype).itemsize
                       for a in (w1, b1, w2, b2, w_head, b_head))
    cost = pl.CostEstimate(
        flops=2 * batch_p * (in_p * h1_p + h1_p * h2_p + h2_p * out_p),
        transcendentals=3 * batch_p * out_p,
        bytes_accessed=batch_p * in_p * itemsize + batch_p * out_p * 4 + weight_bytes,
    )

    out = pl.pallas_call(
        kernel,
        out_shape=jax.ShapeDtypeStruct((batch_p, out_p), jnp.float32),
        grid=grid,
        in_specs=[
            pl.BlockSpec((tile_b, in_p), lambda i: (i, 0)),   # x: tiled over batch
            pl.BlockSpec((in_p, h1_p), const),                # weights: VMEM-resident
            pl.BlockSpec((1, h1_p), const),
            pl.BlockSpec((h1_p, h2_p), const),
            pl.BlockSpec((1, h2_p), const),
            pl.BlockSpec((h2_p, out_p), const),
            pl.BlockSpec((1, out_p), const),
        ],
        out_specs=pl.BlockSpec((tile_b, out_p), lambda i: (i, 0)),
        compiler_params=pltpu.CompilerParams(
            dimension_semantics=("parallel",),
        ),
        cost_estimate=cost,
    )(x_p, w1, b1, w2, b2, w_head, b_head)

    mu = out[:batch, :action_dim]
    std = out[:batch, action_dim:2 * action_dim]
    return mu, std


def init_params(key, state_dim, hidden_dim, hidden_dim1, action_dim):
    """Deterministic synthetic init (uniform, PyTorch-Linear-like fan-in scaling)."""
    keys = jax.random.split(key, 8)

    def lin(kw, kb, fan_in, fan_out):
        bound = 1.0 / jnp.sqrt(jnp.float32(fan_in))
        w = jax.random.uniform(kw, (fan_in, fan_out), jnp.float32, -bound, bound)
        b = jax.random.uniform(kb, (1, fan_out), jnp.float32, -bound, bound)
        return w, b

    w1, b1 = lin(keys[0], keys[1], state_dim, hidden_dim)
    w2, b2 = lin(keys[2], keys[3], hidden_dim, hidden_dim1)
    w_mu, b_mu = lin(keys[4], keys[5], hidden_dim1, action_dim)
    w_std, b_std = lin(keys[6], keys[7], hidden_dim1, action_dim)
    return {
        "w1": w1, "b1": b1,
        "w2": w2, "b2": b2,
        "w_mu": w_mu, "b_mu": b_mu,
        "w_std": w_std, "b_std": b_std,
    }


def reference_forward(x, params, max_action):
    h1 = jnp.maximum(x @ params["w1"] + params["b1"], 0.0)
    h2 = jnp.maximum(h1 @ params["w2"] + params["b2"], 0.0)
    mu = max_action * jnp.tanh(h2 @ params["w_mu"] + params["b_mu"])
    std = jax.nn.softplus(h2 @ params["w_std"] + params["b_std"])
    std = jnp.maximum(std, 1e-6)
    return mu, std


if __name__ == "__main__":
    # Shapes consistent with the module: state_dim=8, hidden=32, hidden1=32, action_dim=4
    state_dim, hidden_dim, hidden_dim1, action_dim = 8, 32, 32, 4
    max_action = 2.0
    batch = 2

    key = jax.random.PRNGKey(0)
    k_params, k_x = jax.random.split(key)
    params = init_params(k_params, state_dim, hidden_dim, hidden_dim1, action_dim)
    x = jax.random.normal(k_x, (batch, state_dim), jnp.float32)

    # f32 path: exact-semantics check against pure-JAX reference.
    mu, std = policy_net_continuous(x, params, max_action)
    jax.block_until_ready((mu, std))

    mu_ref, std_ref = reference_forward(x, params, max_action)
    assert mu.shape == (batch, action_dim) and std.shape == (batch, action_dim)
    assert jnp.allclose(mu, mu_ref, atol=1e-5, rtol=1e-5)
    assert jnp.allclose(std, std_ref, atol=1e-5, rtol=1e-5)
    assert bool(jnp.all(std >= 1e-6))

    # bf16 weights/activations (v6e/v7x memory-bound path): loose tolerance check.
    mu_bf, std_bf = policy_net_continuous(x, params, max_action,
                                          compute_dtype=jnp.bfloat16)
    jax.block_until_ready((mu_bf, std_bf))
    assert mu_bf.shape == (batch, action_dim) and std_bf.shape == (batch, action_dim)
    assert jnp.allclose(mu_bf, mu_ref, atol=5e-2, rtol=5e-2)
    assert jnp.allclose(std_bf, std_ref, atol=5e-2, rtol=5e-2)

    # Larger-batch path exercises the batch grid (multiple tiles) once.
    xb = jax.random.normal(jax.random.PRNGKey(1), (300, state_dim), jnp.float32)
    mu_b, std_b = policy_net_continuous(xb, params, max_action, tile_b=128)
    jax.block_until_ready((mu_b, std_b))
    mu_b_ref, std_b_ref = reference_forward(xb, params, max_action)
    assert jnp.allclose(mu_b, mu_b_ref, atol=1e-5, rtol=1e-5)
    assert jnp.allclose(std_b, std_b_ref, atol=1e-5, rtol=1e-5)

    print("KERNEL_OK")
</pallas_src>

<mosaic_0001>
module attributes {stable_mosaic.version = 11 : i64} {
  func.func @_policy_kernel(%arg0: i32, %arg1: memref<16x128xf32, #tpu.memory_space<vmem>>, %arg2: memref<128x128xf32, #tpu.memory_space<vmem>>, %arg3: memref<1x128xf32, #tpu.memory_space<vmem>>, %arg4: memref<128x128xf32, #tpu.memory_space<vmem>>, %arg5: memref<1x128xf32, #tpu.memory_space<vmem>>, %arg6: memref<128x128xf32, #tpu.memory_space<vmem>>, %arg7: memref<1x128xf32, #tpu.memory_space<vmem>>, %arg8: memref<16x128xf32, #tpu.memory_space<vmem>>) attributes {dimension_semantics = [#tpu.dimension_semantics<parallel>], iteration_bounds = array<i64: 1>, scalar_prefetch = 0 : i64, scratch_operands = 0 : i64, tpu.core_type = #tpu.core_type<tc>, window_params = [{transform_indices = @transform_0, window_bounds = array<i64: 16, 128>}, {pipeline_mode = #tpu.pipeline_mode<synchronous>, transform_indices = @transform_1, window_bounds = array<i64: 128, 128>}, {pipeline_mode = #tpu.pipeline_mode<synchronous>, transform_indices = @transform_2, window_bounds = array<i64: 1, 128>}, {pipeline_mode = #tpu.pipeline_mode<synchronous>, transform_indices = @transform_3, window_bounds = array<i64: 128, 128>}, {pipeline_mode = #tpu.pipeline_mode<synchronous>, transform_indices = @transform_4, window_bounds = array<i64: 1, 128>}, {pipeline_mode = #tpu.pipeline_mode<synchronous>, transform_indices = @transform_5, window_bounds = array<i64: 128, 128>}, {pipeline_mode = #tpu.pipeline_mode<synchronous>, transform_indices = @transform_6, window_bounds = array<i64: 1, 128>}, {transform_indices = @transform_7, window_bounds = array<i64: 16, 128>}]} {
    %c0 = arith.constant 0 : index
    %c0_0 = arith.constant 0 : index
    %0 = vector.load %arg1[%c0, %c0_0] : memref<16x128xf32, #tpu.memory_space<vmem>>, vector<16x128xf32>
    %c0_1 = arith.constant 0 : index
    %c0_2 = arith.constant 0 : index
    %1 = vector.load %arg2[%c0_1, %c0_2] : memref<128x128xf32, #tpu.memory_space<vmem>>, vector<128x128xf32>
    %cst = arith.constant dense<0.000000e+00> : vector<16x128xf32>
    %2 = tpu.matmul %0, %1, %cst {dimension_numbers = #tpu.dot_dimension_numbers<[1], [0], [0], [1], [0, 0, 1, 1], [], []>} : vector<16x128xf32>, vector<128x128xf32>, vector<16x128xf32> -> vector<16x128xf32>
    %c0_3 = arith.constant 0 : index
    %c0_4 = arith.constant 0 : index
    %3 = vector.load %arg3[%c0_3, %c0_4] : memref<1x128xf32, #tpu.memory_space<vmem>>, vector<1x128xf32>
    %4 = vector.broadcast %3 : vector<1x128xf32> to vector<16x128xf32>
    %5 = arith.addf %2, %4 : vector<16x128xf32>
    %cst_5 = arith.constant 0.000000e+00 : f32
    %6 = vector.broadcast %cst_5 : f32 to vector<16x128xf32>
    %7 = arith.maximumf %5, %6 : vector<16x128xf32>
    %c0_6 = arith.constant 0 : index
    %c0_7 = arith.constant 0 : index
    %8 = vector.load %arg4[%c0_6, %c0_7] : memref<128x128xf32, #tpu.memory_space<vmem>>, vector<128x128xf32>
    %cst_8 = arith.constant dense<0.000000e+00> : vector<16x128xf32>
    %9 = tpu.matmul %7, %8, %cst_8 {dimension_numbers = #tpu.dot_dimension_numbers<[1], [0], [0], [1], [0, 0, 1, 1], [], []>} : vector<16x128xf32>, vector<128x128xf32>, vector<16x128xf32> -> vector<16x128xf32>
    %c0_9 = arith.constant 0 : index
    %c0_10 = arith.constant 0 : index
    %10 = vector.load %arg5[%c0_9, %c0_10] : memref<1x128xf32, #tpu.memory_space<vmem>>, vector<1x128xf32>
    %11 = vector.broadcast %10 : vector<1x128xf32> to vector<16x128xf32>
    %12 = arith.addf %9, %11 : vector<16x128xf32>
    %cst_11 = arith.constant 0.000000e+00 : f32
    %13 = vector.broadcast %cst_11 : f32 to vector<16x128xf32>
    %14 = arith.maximumf %12, %13 : vector<16x128xf32>
    %c0_12 = arith.constant 0 : index
    %c0_13 = arith.constant 0 : index
    %15 = vector.load %arg6[%c0_12, %c0_13] : memref<128x128xf32, #tpu.memory_space<vmem>>, vector<128x128xf32>
    %cst_14 = arith.constant dense<0.000000e+00> : vector<16x128xf32>
    %16 = tpu.matmul %14, %15, %cst_14 {dimension_numbers = #tpu.dot_dimension_numbers<[1], [0], [0], [1], [0, 0, 1, 1], [], []>} : vector<16x128xf32>, vector<128x128xf32>, vector<16x128xf32> -> vector<16x128xf32>
    %c0_15 = arith.constant 0 : index
    %c0_16 = arith.constant 0 : index
    %17 = vector.load %arg7[%c0_15, %c0_16] : memref<1x128xf32, #tpu.memory_space<vmem>>, vector<1x128xf32>
    %18 = vector.broadcast %17 : vector<1x128xf32> to vector<16x128xf32>
    %19 = arith.addf %16, %18 : vector<16x128xf32>
    %20 = math.tanh %19 : vector<16x128xf32>
    %cst_17 = arith.constant 2.000000e+00 : f32
    %21 = vector.broadcast %cst_17 : f32 to vector<16x128xf32>
    %22 = arith.mulf %21, %20 : vector<16x128xf32>
    %cst_18 = arith.constant 0.000000e+00 : f32
    %23 = vector.broadcast %cst_18 : f32 to vector<16x128xf32>
    %24 = arith.maximumf %19, %23 : vector<16x128xf32>
    %25 = math.absf %19 : vector<16x128xf32>
    %cst_19 = arith.constant 0.000000e+00 : f32
    %26 = vector.broadcast %cst_19 : f32 to vector<16x128xf32>
    %27 = arith.subf %26, %25 : vector<16x128xf32>
    %28 = math.exp %27 : vector<16x128xf32>
    %29 = math.log1p %28 : vector<16x128xf32>
    %30 = arith.addf %24, %29 : vector<16x128xf32>
    %cst_20 = arith.constant 9.99999997E-7 : f32
    %31 = vector.broadcast %cst_20 : f32 to vector<16x128xf32>
    %32 = arith.maximumf %30, %31 : vector<16x128xf32>
    %33 = tpu.iota {dimensions = array<i32: 1>} : vector<16x128xi32>
    %c4_i32 = arith.constant 4 : i32
    %34 = vector.broadcast %c4_i32 : i32 to vector<16x128xi32>
    %35 = arith.cmpi slt, %33, %34 : vector<16x128xi32>
    %36 = arith.select %35, %22, %32 : vector<16x128xi1>, vector<16x128xf32>
    %c0_21 = arith.constant 0 : index
    %c0_22 = arith.constant 0 : index
    %37 = vector.load %arg8[%c0_21, %c0_22] : memref<16x128xf32, #tpu.memory_space<vmem>>, vector<16x128xf32>
    tpu.vector_store %arg8[%c0_21, %c0_22], %36 {strides = array<i32>} : memref<16x128xf32, #tpu.memory_space<vmem>>, vector<16x128xf32>,
    return
  }
  func.func @transform_0(%arg0: i32) -> (i32, i32) {
    %c0_i32 = arith.constant 0 : i32
    %c0_i32_0 = arith.constant 0 : i32
    return %arg0, %c0_i32 : i32, i32
  }
  func.func @transform_1(%arg0: i32) -> (i32, i32) {
    %c0_i32 = arith.constant 0 : i32
    %c0_i32_0 = arith.constant 0 : i32
    %c0_i32_1 = arith.constant 0 : i32
    return %c0_i32, %c0_i32_0 : i32, i32
  }
  func.func @transform_2(%arg0: i32) -> (i32, i32) {
    %c0_i32 = arith.constant 0 : i32
    %c0_i32_0 = arith.constant 0 : i32
    %c0_i32_1 = arith.constant 0 : i32
    return %c0_i32, %c0_i32_0 : i32, i32
  }
  func.func @transform_3(%arg0: i32) -> (i32, i32) {
    %c0_i32 = arith.constant 0 : i32
    %c0_i32_0 = arith.constant 0 : i32
    %c0_i32_1 = arith.constant 0 : i32
    return %c0_i32, %c0_i32_0 : i32, i32
  }
  func.func @transform_4(%arg0: i32) -> (i32, i32) {
    %c0_i32 = arith.constant 0 : i32
    %c0_i32_0 = arith.constant 0 : i32
    %c0_i32_1 = arith.constant 0 : i32
    return %c0_i32, %c0_i32_0 : i32, i32
  }
  func.func @transform_5(%arg0: i32) -> (i32, i32) {
    %c0_i32 = arith.constant 0 : i32
    %c0_i32_0 = arith.constant 0 : i32
    %c0_i32_1 = arith.constant 0 : i32
    return %c0_i32, %c0_i32_0 : i32, i32
  }
  func.func @transform_6(%arg0: i32) -> (i32, i32) {
    %c0_i32 = arith.constant 0 : i32
    %c0_i32_0 = arith.constant 0 : i32
    %c0_i32_1 = arith.constant 0 : i32
    return %c0_i32, %c0_i32_0 : i32, i32
  }
  func.func @transform_7(%arg0: i32) -> (i32, i32) {
    %c0_i32 = arith.constant 0 : i32
    %c0_i32_0 = arith.constant 0 : i32
    return %arg0, %c0_i32 : i32, i32
  }
}

</mosaic_0001>

<llo_original>
// kernel: tpu_custom_call.1
$region0: #{tpu_custom_call.1}
  #allocation0 [shape = 'u32[]', space=smem, size = 0x4, offset = 0x4, fixed_abs, tag = 'smem constant byte address 0x4 - core index']
  #allocation1 [shape = 'u32[72,128]{1,0:T(1,128)}', space=vmem, size = 0x9000, scoped, tag = 'internal scratch']
  %s0 = inlined_call_operand.hbm [shape: f32[16,128], index: 0, kind: input, shape index: {}]
  %s1 = inlined_call_operand.hbm [shape: f32[128,128], index: 1, kind: input, shape index: {}]
  %s2 = inlined_call_operand.vmem [shape: f32[1,128], index: 2, kind: input, shape index: {}]
  %s3 = inlined_call_operand.hbm [shape: f32[128,128], index: 3, kind: input, shape index: {}]
  %s4 = inlined_call_operand.vmem [shape: f32[1,128], index: 4, kind: input, shape index: {}]
  %s5 = inlined_call_operand.hbm [shape: f32[128,128], index: 5, kind: input, shape index: {}]
  %s6 = inlined_call_operand.vmem [shape: f32[1,128], index: 6, kind: input, shape index: {}]
  %s7 = inlined_call_operand.hbm [shape: f32[16,128], index: 7, kind: output, shape index: {}]
  %s8 = sld [smem:[#allocation0]]
  $region54: #{tpu_custom_call.1} parent=0
    _
  %s10 = ssub.s32 1, %s8
  %s11 = scalar_select 0, %s10, %s8
  $region1: #{tpu_custom_call.1} parent=0
    #allocation2 [shape = 'u8[8192]{0}', space=vmem, size = 0x2000, scoped, tag = 'input window, operand 0, single buffered']
    #allocation3 [shape = 's32[1]{0}', space=sflag, size = 0x4, scoped, tag = 'scoped memory for tpu_custom_call.1']
    #allocation4 [shape = 's32[1]{0}', space=sflag, size = 0x4, scoped, tag = 'scoped memory for tpu_custom_call.1']
    #allocation5 [shape = 'u8[65536]{0}', space=vmem, size = 0x10000, scoped, tag = 'input window, operand 1, single buffered']
    #allocation6 [shape = 's32[1]{0}', space=sflag, size = 0x4, scoped, tag = 'scoped memory for tpu_custom_call.1']
    #allocation7 [shape = 'u8[65536]{0}', space=vmem, size = 0x10000, scoped, tag = 'input window, operand 3, single buffered']
    #allocation8 [shape = 'u8[65536]{0}', space=vmem, size = 0x10000, scoped, tag = 'input window, operand 5, single buffered']
    #allocation9 [shape = 's32[1]{0}', space=sflag, size = 0x4, scoped, tag = 'scoped memory for tpu_custom_call.1']
    #allocation10 [shape = 'u8[8192]{0}', space=vmem, size = 0x2000, scoped, tag = 'output window, operand 0, single buffered']
    %12 = vsyncpa [#allocation3], 0
    %13 = vsyncpa [#allocation6], 0
    %14 = vsyncpa [#allocation9], 0
    %15 = vsyncpa [#allocation4], 0
    // Predicated region
    $region2: #{tpu_custom_call.1} parent=1 // pred_check
      _
    $region3: #{tpu_custom_call.1} parent=1 // pred_check_branch
      %17 = sbr.rel (0) target = $region5
    $region4: #{tpu_custom_call.1} parent=1 // pred_region
      %19 = vsyncadd [#allocation3], 0
      %s20 = sshll.u32 %s0, 4
      %s21 = int_to_ptr.hbm [resolvable:$true] %s20
      %s22 = sshll.u32 [#allocation2], 4
      %s23 = int_to_ptr.vmem [resolvable:$true] %s22
      %28 = dma.hbm_to_vmem [thread:$0]  %s21, 256, %s23, [#allocation3], 128, 128, 8
    $region5: #{tpu_custom_call.1} parent=1 // pred_fallthru
      _
    // Predicated region
    $region6: #{tpu_custom_call.1} parent=1 // pred_check
      _
    $region7: #{tpu_custom_call.1} parent=1 // pred_check_branch
      %30 = sbr.rel (0) target = $region9
    $region8: #{tpu_custom_call.1} parent=1 // pred_region
      %32 = vsyncadd [#allocation6], 0
      %s33 = sshll.u32 %s1, 4
      %s34 = int_to_ptr.hbm [resolvable:$true] %s33
      %s35 = sshll.u32 [#allocation5], 4
      %s36 = int_to_ptr.vmem [resolvable:$true] %s35
      %41 = dma.hbm_to_vmem [thread:$0]  %s34, 2048, %s36, [#allocation6], 128, 128, 8
    $region9: #{tpu_custom_call.1} parent=1 // pred_fallthru
      _
    // Predicated region
    $region10: #{tpu_custom_call.1} parent=1 // pred_check
      _
    $region11: #{tpu_custom_call.1} parent=1 // pred_check_branch
      %43 = sbr.rel (0) target = $region13
    $region12: #{tpu_custom_call.1} parent=1 // pred_region
      _
    $region13: #{tpu_custom_call.1} parent=1 // pred_fallthru
      _
    // Predicated region
    $region14: #{tpu_custom_call.1} parent=1 // pred_check
      _
    $region15: #{tpu_custom_call.1} parent=1 // pred_check_branch
      %45 = sbr.rel (0) target = $region17
    $region16: #{tpu_custom_call.1} parent=1 // pred_region
      %47 = vsyncadd [#allocation6], 0
      %s48 = sshll.u32 %s3, 4
      %s49 = int_to_ptr.hbm [resolvable:$true] %s48
      %s50 = sshll.u32 [#allocation7], 4
      %s51 = int_to_ptr.vmem [resolvable:$true] %s50
      %56 = dma.hbm_to_vmem [thread:$0]  %s49, 2048, %s51, [#allocation6], 128, 128, 8
    $region17: #{tpu_custom_call.1} parent=1 // pred_fallthru
      _
    // Predicated region
    $region18: #{tpu_custom_call.1} parent=1 // pred_check
      _
    $region19: #{tpu_custom_call.1} parent=1 // pred_check_branch
      %58 = sbr.rel (0) target = $region21
    $region20: #{tpu_custom_call.1} parent=1 // pred_region
      _
    $region21: #{tpu_custom_call.1} parent=1 // pred_fallthru
      _
    // Predicated region
    $region22: #{tpu_custom_call.1} parent=1 // pred_check
      _
    $region23: #{tpu_custom_call.1} parent=1 // pred_check_branch
      %60 = sbr.rel (0) target = $region25
    $region24: #{tpu_custom_call.1} parent=1 // pred_region
      %62 = vsyncadd [#allocation9], 0
      %s63 = sshll.u32 %s5, 4
      %s64 = int_to_ptr.hbm [resolvable:$true] %s63
      %s65 = sshll.u32 [#allocation8], 4
      %s66 = int_to_ptr.vmem [resolvable:$true] %s65
      %71 = dma.hbm_to_vmem [thread:$0]  %s64, 2048, %s66, [#allocation9], 128, 128, 8
    $region25: #{tpu_custom_call.1} parent=1 // pred_fallthru
      _
    // Predicated region
    $region26: #{tpu_custom_call.1} parent=1 // pred_check
      _
    $region27: #{tpu_custom_call.1} parent=1 // pred_check_branch
      %73 = sbr.rel (0) target = $region29
    $region28: #{tpu_custom_call.1} parent=1 // pred_region
      _
    $region29: #{tpu_custom_call.1} parent=1 // pred_fallthru
      _
    // Predicated region
    $region30: #{tpu_custom_call.1} parent=1 // pred_check
      _
    $region31: #{tpu_custom_call.1} parent=1 // pred_check_branch
      %75 = sbr.rel (0) target = $region33
    $region32: #{tpu_custom_call.1} parent=1 // pred_region
      %77 = dma.done [#allocation3], 256
    $region33: #{tpu_custom_call.1} parent=1 // pred_fallthru
      _
    // Predicated region
    $region34: #{tpu_custom_call.1} parent=1 // pred_check
      _
    $region35: #{tpu_custom_call.1} parent=1 // pred_check_branch
      %79 = sbr.rel (0) target = $region37
    $region36: #{tpu_custom_call.1} parent=1 // pred_region
      %81 = dma.done [#allocation6], 2048
    $region37: #{tpu_custom_call.1} parent=1 // pred_fallthru
      _
    // Predicated region
    $region38: #{tpu_custom_call.1} parent=1 // pred_check
      _
    $region39: #{tpu_custom_call.1} parent=1 // pred_check_branch
      %83 = sbr.rel (0) target = $region41
    $region40: #{tpu_custom_call.1} parent=1 // pred_region
      %85 = dma.done [#allocation6], 2048
    $region41: #{tpu_custom_call.1} parent=1 // pred_fallthru
      _
    // Predicated region
    $region42: #{tpu_custom_call.1} parent=1 // pred_check
      _
    $region43: #{tpu_custom_call.1} parent=1 // pred_check_branch
      %87 = sbr.rel (0) target = $region45
    $region44: #{tpu_custom_call.1} parent=1 // pred_region
      %89 = dma.done [#allocation9], 2048
    $region45: #{tpu_custom_call.1} parent=1 // pred_fallthru
      _
    %v90 = vld [vmem:[#allocation2] sm:$0xff]
    %v91 = vld [vmem:[#allocation2 + $0x8] sm:$0xff]
    %v92 = vld [vmem:[#allocation5] sm:$0xff]
    %v93 = vld [vmem:[#allocation5 + $0x8] sm:$0xff]
    %v94 = vld [vmem:[#allocation5 + $0x10] sm:$0xff]
    %v95 = vld [vmem:[#allocation5 + $0x18] sm:$0xff]
    %v96 = vld [vmem:[#allocation5 + $0x20] sm:$0xff]
    %v97 = vld [vmem:[#allocation5 + $0x28] sm:$0xff]
    %v98 = vld [vmem:[#allocation5 + $0x30] sm:$0xff]
    %v99 = vld [vmem:[#allocation5 + $0x38] sm:$0xff]
    %v100 = vld [vmem:[#allocation5 + $0x40] sm:$0xff]
    %v101 = vld [vmem:[#allocation5 + $0x48] sm:$0xff]
    %v102 = vld [vmem:[#allocation5 + $0x50] sm:$0xff]
    %v103 = vld [vmem:[#allocation5 + $0x58] sm:$0xff]
    %v104 = vld [vmem:[#allocation5 + $0x60] sm:$0xff]
    %v105 = vld [vmem:[#allocation5 + $0x68] sm:$0xff]
    %v106 = vld [vmem:[#allocation5 + $0x70] sm:$0xff]
    %v107 = vld [vmem:[#allocation5 + $0x78] sm:$0xff]
    %v108 = vld [vmem:[%s2] sm:$0x1]
    %v110 = vperm.slane %v108, 0
    %112 = vmatpush.msra.mxu0 %v107
    %113 = vmatpush.msra.mxu0 %v106
    %114 = vmatpush.msra.mxu0 %v105
    %115 = vmatpush.msra.mxu0 %v104
    %116 = vmatpush.msra.mxu0 %v103
    %117 = vmatpush.msra.mxu0 %v102
    %118 = vmatpush.msra.mxu0 %v101
    %119 = vmatpush.msra.mxu0 %v100
    %120 = vmatpush.msra.mxu0 %v99
    %121 = vmatpush.msra.mxu0 %v98
    %122 = vmatpush.msra.mxu0 %v97
    %123 = vmatpush.msra.mxu0 %v96
    %124 = vmatpush.msra.mxu0 %v95
    %125 = vmatpush.msra.mxu0 %v94
    %126 = vmatpush.msra.mxu0 %v93
    %127 = vmatpush.msra.mxu0 %v92
    %128 = vmatmul.f32.gmra.mxu0 %v90
    %v129 = vpop.f32.mrf.mxu0
    %v130 = vadd.f32 %v110, %v129
    %131 = vmatmul.f32.gmra.mxu0 %v91
    %v132 = vpop.f32.mrf.mxu0
    %v133 = vadd.f32 %v110, %v132
    %134 = vdwg.mxu0
    %v135 = vmax.f32 %v130, 0.0
    %v136 = vmax.f32 %v133, 0.0
    %v137 = vld [vmem:[#allocation7] sm:$0xff]
    %v138 = vld [vmem:[#allocation7 + $0x8] sm:$0xff]
    %v139 = vld [vmem:[#allocation7 + $0x10] sm:$0xff]
    %v140 = vld [vmem:[#allocation7 + $0x18] sm:$0xff]
    %v141 = vld [vmem:[#allocation7 + $0x20] sm:$0xff]
    %v142 = vld [vmem:[#allocation7 + $0x28] sm:$0xff]
    %v143 = vld [vmem:[#allocation7 + $0x30] sm:$0xff]
    %v144 = vld [vmem:[#allocation7 + $0x38] sm:$0xff]
    %v145 = vld [vmem:[#allocation7 + $0x40] sm:$0xff]
    %v146 = vld [vmem:[#allocation7 + $0x48] sm:$0xff]
    %v147 = vld [vmem:[#allocation7 + $0x50] sm:$0xff]
    %v148 = vld [vmem:[#allocation7 + $0x58] sm:$0xff]
    %v149 = vld [vmem:[#allocation7 + $0x60] sm:$0xff]
    %v150 = vld [vmem:[#allocation7 + $0x68] sm:$0xff]
    %v151 = vld [vmem:[#allocation7 + $0x70] sm:$0xff]
    %v152 = vld [vmem:[#allocation7 + $0x78] sm:$0xff]
    %v153 = vld [vmem:[%s4] sm:$0x1]
    %v155 = vperm.slane %v153, 0
    %157 = vmatpush.msra.mxu0 %v152
    %158 = vmatpush.msra.mxu0 %v151
    %159 = vmatpush.msra.mxu0 %v150
    %160 = vmatpush.msra.mxu0 %v149
    %161 = vmatpush.msra.mxu0 %v148
    %162 = vmatpush.msra.mxu0 %v147
    %163 = vmatpush.msra.mxu0 %v146
    %164 = vmatpush.msra.mxu0 %v145
    %165 = vmatpush.msra.mxu0 %v144
    %166 = vmatpush.msra.mxu0 %v143
    %167 = vmatpush.msra.mxu0 %v142
    %168 = vmatpush.msra.mxu0 %v141
    %169 = vmatpush.msra.mxu0 %v140
    %170 = vmatpush.msra.mxu0 %v139
    %171 = vmatpush.msra.mxu0 %v138
    %172 = vmatpush.msra.mxu0 %v137
    %173 = vmatmul.f32.gmra.mxu0 %v135
    %v174 = vpop.f32.mrf.mxu0
    %v175 = vadd.f32 %v155, %v174
    %176 = vmatmul.f32.gmra.mxu0 %v136
    %v177 = vpop.f32.mrf.mxu0
    %v178 = vadd.f32 %v155, %v177
    %179 = vdwg.mxu0
    %v180 = vmax.f32 %v175, 0.0
    %v181 = vmax.f32 %v178, 0.0
    %v182 = vld [vmem:[#allocation8] sm:$0xff]
    %v183 = vld [vmem:[#allocation8 + $0x8] sm:$0xff]
    %v184 = vld [vmem:[#allocation8 + $0x10] sm:$0xff]
    %v185 = vld [vmem:[#allocation8 + $0x18] sm:$0xff]
    %v186 = vld [vmem:[#allocation8 + $0x20] sm:$0xff]
    %v187 = vld [vmem:[#allocation8 + $0x28] sm:$0xff]
    %v188 = vld [vmem:[#allocation8 + $0x30] sm:$0xff]
    %v189 = vld [vmem:[#allocation8 + $0x38] sm:$0xff]
    %v190 = vld [vmem:[#allocation8 + $0x40] sm:$0xff]
    %v191 = vld [vmem:[#allocation8 + $0x48] sm:$0xff]
    %v192 = vld [vmem:[#allocation8 + $0x50] sm:$0xff]
    %v193 = vld [vmem:[#allocation8 + $0x58] sm:$0xff]
    %v194 = vld [vmem:[#allocation8 + $0x60] sm:$0xff]
    %v195 = vld [vmem:[#allocation8 + $0x68] sm:$0xff]
    %v196 = vld [vmem:[#allocation8 + $0x70] sm:$0xff]
    %v197 = vld [vmem:[#allocation8 + $0x78] sm:$0xff]
    %v198 = vld [vmem:[%s6] sm:$0x1]
    %v200 = vperm.slane %v198, 0
    %202 = vmatpush.msra.mxu0 %v197
    %203 = vmatpush.msra.mxu0 %v196
    %204 = vmatpush.msra.mxu0 %v195
    %205 = vmatpush.msra.mxu0 %v194
    %206 = vmatpush.msra.mxu0 %v193
    %207 = vmatpush.msra.mxu0 %v192
    %208 = vmatpush.msra.mxu0 %v191
    %209 = vmatpush.msra.mxu0 %v190
    %210 = vmatpush.msra.mxu0 %v189
    %211 = vmatpush.msra.mxu0 %v188
    %212 = vmatpush.msra.mxu0 %v187
    %213 = vmatpush.msra.mxu0 %v186
    %214 = vmatpush.msra.mxu0 %v185
    %215 = vmatpush.msra.mxu0 %v184
    %216 = vmatpush.msra.mxu0 %v183
    %217 = vmatpush.msra.mxu0 %v182
    %218 = vmatmul.f32.gmra.mxu0 %v180
    %v219 = vpop.f32.mrf.mxu0
    %v220 = vadd.f32 %v200, %v219
    %221 = vmatmul.f32.gmra.mxu0 %v181
    %v222 = vpop.f32.mrf.mxu0
    %v223 = vadd.f32 %v200, %v222
    %224 = vdwg.mxu0
    %v225 = vtanh.pop %v220
    %v226 = vtanh.pop %v223
    %v227 = vmul.f32 %v225, 2.0
    %v228 = vmul.f32 %v226, 2.0
    %v229 = vmax.f32 %v220, 0.0
    %v230 = vmax.f32 %v223, 0.0
    %v231 = vand.u32 2147483647, %v220
    %v232 = vand.u32 2147483647, %v223
    %v233 = vsub.f32 0.0, %v231
    %v234 = vsub.f32 0.0, %v232
    %v235 = vmul.f32 %v233, 1.442695
    %v236 = vpow.pop %v235
    %v237 = vmul.f32 %v234, 1.442695
    %v238 = vpow.pop %v237
    %v239 = vadd.f32 %v236, 1.0
    %v240 = vlog2.pop %v239
    %v241 = vmul.f32 %v240, 0.6931472
    %v242 = vmul.f32 -0.5, %v236
    %v243 = vadd.f32 %v242, 1.0
    %v244 = vmul.f32 %v243, %v236
    %v245 = vand.u32 2147483647, %v236
    %vm246 = vcmp.lt.f32.partialorder %v245, 0.0004427343
    %v247 = vsel %vm246, %v244, %v241
    %v248 = vadd.f32 %v238, 1.0
    %v249 = vlog2.pop %v248
    %v250 = vmul.f32 %v249, 0.6931472
    %v251 = vmul.f32 -0.5, %v238
    %v252 = vadd.f32 %v251, 1.0
    %v253 = vmul.f32 %v252, %v238
    %v254 = vand.u32 2147483647, %v238
    %vm255 = vcmp.lt.f32.partialorder %v254, 0.0004427343
    %v256 = vsel %vm255, %v253, %v250
    %v257 = vadd.f32 %v229, %v247
    %v258 = vadd.f32 %v230, %v256
    %v259 = vmax.f32 %v257, 1e-06
    %v260 = vmax.f32 %v258, 1e-06
    %v261 = vlaneseq
    %v262 = vand.u32 %v261, 127
    %vm263 = vcmp.lt.s32.totalorder %v262, 4
    %v264 = vsel %vm263, %v227, %v259
    %v265 = vsel %vm263, %v228, %v260
    %266 = vst [vmem:[#allocation10] sm:$0xff] %v264
    %267 = vst [vmem:[#allocation10 + $0x8] sm:$0xff] %v265
    // Predicated region
    $region46: #{tpu_custom_call.1} parent=1 // pred_check
      _
    $region47: #{tpu_custom_call.1} parent=1 // pred_check_branch
      %269 = sbr.rel (0) target = $region49
    $region48: #{tpu_custom_call.1} parent=1 // pred_region
      %271 = vsyncadd [#allocation4], 0
      %s272 = sshll.u32 [#allocation10], 4
      %s273 = int_to_ptr.vmem [resolvable:$true] %s272
      %s274 = sshll.u32 %s7, 4
      %s275 = int_to_ptr.hbm [resolvable:$true] %s274
      %280 = dma.vmem_to_hbm [thread:$0]  %s273, 256, %s275, [#allocation4], 128, 128, 8
    $region49: #{tpu_custom_call.1} parent=1 // pred_fallthru
      _
    // Predicated region
    $region50: #{tpu_custom_call.1} parent=1 // pred_check
      _
    $region51: #{tpu_custom_call.1} parent=1 // pred_check_branch
      %282 = sbr.rel (0) target = $region53
    $region52: #{tpu_custom_call.1} parent=1 // pred_region
      %284 = dma.done [#allocation4], 256
    $region53: #{tpu_custom_call.1} parent=1 // pred_fallthru
      _
    %285 = vsyncpa [#allocation3], 1
    %286 = vsyncpa [#allocation6], 1
    %287 = vsyncpa [#allocation9], 1
    %288 = vsyncpa [#allocation4], 1

</llo_original>
